<compile_context>
chip_gen: v5e
topology: v5e:2x2
jax: 0.10.0
libtpu: 0.0.40
codegen_flags: <defaults>
</compile_context>

<pallas_src>
import functools

import jax
import jax.numpy as jnp
from jax.experimental import pallas as pl
from jax.experimental.pallas import tpu as pltpu


def _half_instance_kernel(x_ref, o_ref, *, eps, inv_hw):
    # Block shape: (Nb, 1, Cb, H*W) -- Nb samples x Cb channels of the *first*
    # half, spatial plane flattened into the lane dimension.
    x = x_ref[...].astype(jnp.float32)
    s = jnp.sum(x, axis=-1, keepdims=True)
    sq = jnp.sum(x * x, axis=-1, keepdims=True)
    mean = s * inv_hw
    # Biased variance via E[x^2] - mean^2; clamp >= 0 against cancellation.
    var = jnp.maximum(sq * inv_hw - mean * mean, 0.0)
    o_ref[...] = ((x - mean) * jax.lax.rsqrt(var + eps)).astype(o_ref.dtype)


def _tpu_tile_budget_and_cap():
    """(per-step tile budget, hard VMEM cap for the pipelined footprint)."""
    kind = ""
    try:
        kind = jax.devices()[0].device_kind.lower()
    except Exception:
        pass
    if "v7" in kind:
        # 3.2 TB/s HBM: big tiles amortize the ~0.35us/step overhead; but only
        # 64 MiB VMEM/TC, keep the double-buffered footprint under ~48 MiB.
        return 6 << 20, 48 << 20
    if "v5" in kind and ("lite" in kind or "v5e" in kind):
        # 0.82 TB/s HBM: ~2 MiB tiles already sit near roofline; 16 MiB scoped
        # default, so stay small unless vmem_limit_bytes is raised.
        return 2 << 20, 96 << 20
    if "v6" in kind:
        return 4 << 20, 96 << 20
    return 2 << 20, 48 << 20  # unknown chip: conservative


def _pick_channel_block(half, hw, itemsize, target_bytes, vmem_cap_bytes):
    """Largest layout-friendly channel block whose (cb, hw) tile fits target_bytes.

    hw is always the full last dim (unconstrained). cb must be a multiple of
    the dtype's sublane-packing factor (8 f32, 16 bf16, 32 int8/fp8) or equal
    the full `half` extent to keep clean (8, 128) vreg tiling.
    """
    align = max(8, 32 // max(itemsize, 1))

    def nbytes(cb):
        return cb * hw * itemsize

    if nbytes(half) <= target_bytes:
        return half
    aligned = [cb for cb in range(align, half, align) if half % cb == 0]
    fitting = [cb for cb in aligned if nbytes(cb) <= target_bytes]
    if fitting:
        return max(fitting)
    # Nothing aligned fits the soft target: take the smallest aligned divisor,
    # or the full half (full-extent blocks are always layout-legal), whichever
    # keeps a double-buffered in+out pipeline plus f32 temporaries under the
    # hard VMEM cap.
    candidates = ([min(aligned)] if aligned else []) + [half]
    for cb in sorted(candidates):
        if 4 * nbytes(cb) + 2 * cb * hw * 4 <= vmem_cap_bytes:
            return cb
    # TODO(synk): split the H*W axis with a two-pass (accumulating) kernel for
    # shapes whose smallest legal channel block still exceeds VMEM.
    return min(candidates)


def half_instance_forward(x, eps=1e-5, target_block_bytes=None):
    """InstanceNorm2d on the first channel half, passthrough on the second.

    For the claimed ~2x HBM saving, call this under
    jax.jit(half_instance_forward, donate_argnums=(0,)) so the output can
    alias (and skip rewriting) the untouched channel half.
    """
    n, c, h, w = x.shape
    assert c % 2 == 0, "half_instance expects an even channel count"
    half = c // 2
    hw = h * w
    itemsize = jnp.dtype(x.dtype).itemsize

    budget, vmem_cap = _tpu_tile_budget_and_cap()
    if target_block_bytes is not None:
        budget = target_block_bytes

    # Free view for contiguous NCHW: channels split into (2, half), spatial flattened.
    x4 = x.reshape(n, 2, half, hw)

    cb = _pick_channel_block(half, hw, itemsize, budget, vmem_cap)

    # When one sample's whole half-plane is far below the budget, extend the
    # block over the batch axis (reduction stays axis=-1, so per-(n, c)
    # statistics are unchanged). Keep >= 2 blocks on the batch grid axis when
    # possible so v7x's second TensorCore has work to split.
    nb = 1
    if cb == half:
        plane_bytes = max(half * hw * itemsize, 1)
        max_nb = max(1, budget // plane_bytes)
        if n >= 2:
            max_nb = min(max_nb, n // 2)
        max_nb = min(max_nb, n)
        nb = next(cand for cand in range(int(max_nb), 0, -1) if n % cand == 0)

    tile_bytes = nb * cb * hw * itemsize
    tile_f32_bytes = nb * cb * hw * 4
    # 2 refs x 2 buffers x tile + ~2 tiles of f32 temporaries + headroom.
    needed = 4 * tile_bytes + 2 * tile_f32_bytes + (2 << 20)
    vmem_limit = int(min(max(needed, 16 << 20), vmem_cap))

    kernel = functools.partial(_half_instance_kernel, eps=eps, inv_hw=1.0 / hw)

    out4 = pl.pallas_call(
        kernel,
        out_shape=jax.ShapeDtypeStruct(x4.shape, x4.dtype),
        grid=(n // nb, half // cb),
        # Only the first channel half (axis-1 block index 0) is ever visited.
        in_specs=[pl.BlockSpec((nb, 1, cb, hw), lambda i, j: (i, 0, j, 0))],
        out_specs=pl.BlockSpec((nb, 1, cb, hw), lambda i, j: (i, 0, j, 0)),
        # Output aliases the input: passthrough channels are never touched, so
        # they keep their original values and cost zero HBM traffic (when the
        # caller donates x).
        input_output_aliases={0: 0},
        compiler_params=pltpu.CompilerParams(
            dimension_semantics=("parallel", "parallel"),
            vmem_limit_bytes=vmem_limit,
        ),
    )(x4)
    return out4.reshape(n, c, h, w)


def _reference(x, eps=1e-5):
    c = x.shape[1]
    half = c // 2
    x1, x2 = x[:, :half], x[:, half:]
    mean = jnp.mean(x1, axis=(2, 3), keepdims=True)
    var = jnp.mean((x1 - mean) ** 2, axis=(2, 3), keepdims=True)
    x1n = (x1 - mean) / jnp.sqrt(var + eps)
    return jnp.concatenate([x1n, x2], axis=1)


if __name__ == "__main__":
    key = jax.random.PRNGKey(0)
    x = jax.random.normal(key, (2, 4, 16, 16), dtype=jnp.float32)

    # Compute the reference first: the kernel call below donates x.
    ref = jax.block_until_ready(_reference(x))

    fwd = jax.jit(half_instance_forward, donate_argnums=(0,))
    out = jax.block_until_ready(fwd(x))

    assert out.shape == (2, 4, 16, 16)
    assert jnp.allclose(out, ref, atol=1e-5, rtol=1e-5), "mismatch vs reference"
    print("KERNEL_OK")
</pallas_src>

<mosaic_0001>
module attributes {stable_mosaic.version = 11 : i64} {
  func.func @_half_instance_kernel(%arg0: i32, %arg1: i32, %arg2: memref<1x1x2x256xf32, #tpu.memory_space<vmem>>, %arg3: memref<1x1x2x256xf32, #tpu.memory_space<vmem>>) attributes {dimension_semantics = [#tpu.dimension_semantics<parallel>, #tpu.dimension_semantics<parallel>], iteration_bounds = array<i64: 2, 1>, scalar_prefetch = 0 : i64, scratch_operands = 0 : i64, tpu.core_type = #tpu.core_type<tc>, window_params = [{transform_indices = @transform_0, window_bounds = array<i64: 1, 1, 2, 256>}, {transform_indices = @transform_1, window_bounds = array<i64: 1, 1, 2, 256>}]} {
    %c0 = arith.constant 0 : index
    %c0_0 = arith.constant 0 : index
    %c0_1 = arith.constant 0 : index
    %c0_2 = arith.constant 0 : index
    %0 = vector.load %arg2[%c0, %c0_0, %c0_1, %c0_2] : memref<1x1x2x256xf32, #tpu.memory_space<vmem>>, vector<1x1x2x256xf32>
    %cst = arith.constant dense<0.000000e+00> : vector<1x1x2xf32>
    %1 = vector.multi_reduction <add>, %0, %cst [3] : vector<1x1x2x256xf32> to vector<1x1x2xf32>
    %2 = vector.shape_cast %1 : vector<1x1x2xf32> to vector<1x1x2x1xf32>
    %3 = arith.mulf %0, %0 : vector<1x1x2x256xf32>
    %cst_3 = arith.constant dense<0.000000e+00> : vector<1x1x2xf32>
    %4 = vector.multi_reduction <add>, %3, %cst_3 [3] : vector<1x1x2x256xf32> to vector<1x1x2xf32>
    %5 = vector.shape_cast %4 : vector<1x1x2xf32> to vector<1x1x2x1xf32>
    %cst_4 = arith.constant 3.906250e-03 : f32
    %6 = vector.broadcast %cst_4 : f32 to vector<1x1x2x1xf32>
    %7 = arith.mulf %2, %6 : vector<1x1x2x1xf32>
    %cst_5 = arith.constant 3.906250e-03 : f32
    %8 = vector.broadcast %cst_5 : f32 to vector<1x1x2x1xf32>
    %9 = arith.mulf %5, %8 : vector<1x1x2x1xf32>
    %10 = arith.mulf %7, %7 : vector<1x1x2x1xf32>
    %11 = arith.subf %9, %10 : vector<1x1x2x1xf32>
    %cst_6 = arith.constant 0.000000e+00 : f32
    %12 = vector.broadcast %cst_6 : f32 to vector<1x1x2x1xf32>
    %13 = arith.maximumf %11, %12 : vector<1x1x2x1xf32>
    %14 = vector.broadcast %7 : vector<1x1x2x1xf32> to vector<1x1x2x256xf32>
    %15 = arith.subf %0, %14 : vector<1x1x2x256xf32>
    %cst_7 = arith.constant 9.99999974E-6 : f32
    %16 = vector.broadcast %cst_7 : f32 to vector<1x1x2x1xf32>
    %17 = arith.addf %13, %16 : vector<1x1x2x1xf32>
    %18 = math.rsqrt %17 : vector<1x1x2x1xf32>
    %19 = vector.broadcast %18 : vector<1x1x2x1xf32> to vector<1x1x2x256xf32>
    %20 = arith.mulf %15, %19 : vector<1x1x2x256xf32>
    %c0_8 = arith.constant 0 : index
    %c0_9 = arith.constant 0 : index
    %c0_10 = arith.constant 0 : index
    %c0_11 = arith.constant 0 : index
    %21 = vector.load %arg3[%c0_8, %c0_9, %c0_10, %c0_11] : memref<1x1x2x256xf32, #tpu.memory_space<vmem>>, vector<1x1x2x256xf32>
    tpu.vector_store %arg3[%c0_8, %c0_9, %c0_10, %c0_11], %20 {strides = array<i32>} : memref<1x1x2x256xf32, #tpu.memory_space<vmem>>, vector<1x1x2x256xf32>,
    return
  }
  func.func @transform_0(%arg0: i32, %arg1: i32) -> (i32, i32, i32, i32) {
    %c0_i32 = arith.constant 0 : i32
    %c0_i32_0 = arith.constant 0 : i32
    %c0_i32_1 = arith.constant 0 : i32
    return %arg0, %c0_i32, %arg1, %c0_i32_0 : i32, i32, i32, i32
  }
  func.func @transform_1(%arg0: i32, %arg1: i32) -> (i32, i32, i32, i32) {
    %c0_i32 = arith.constant 0 : i32
    %c0_i32_0 = arith.constant 0 : i32
    %c0_i32_1 = arith.constant 0 : i32
    return %arg0, %c0_i32, %arg1, %c0_i32_0 : i32, i32, i32, i32
  }
}

</mosaic_0001>

<llo_original>
// kernel: half_instance_forward.1
$region0: #{half_instance_forward.1}
  #allocation0 [shape = 'u32[]', space=smem, size = 0x4, offset = 0x4, fixed_abs, tag = 'smem constant byte address 0x4 - core index']
  #allocation1 [shape = 'u32[72,128]{1,0:T(1,128)}', space=vmem, size = 0x9000, scoped, tag = 'internal scratch']
  %s0 = inlined_call_operand.vmem [shape: f32[2,2,2,256], index: 0, kind: input, shape index: {}, may-alias: {0,1}]
  %s1 = inlined_call_operand.vmem [shape: f32[2,2,2,256], index: 1, kind: output, shape index: {}, may-alias: {0,1}]
  %s2 = sld [smem:[#allocation0]]
  $region37: #{half_instance_forward.1} parent=0
    _
  %s4 = ssub.s32 1, %s2
  %s5 = scalar_select 0, %s4, %s2
  loop: start=0, step=1, limit=4
  $region2: #{half_instance_forward.1} parent=0 // loop_pre_header
    _
  $region3: #{half_instance_forward.1} parent=0 // loop_header
    %s7 = sphi 0, %s11
    %p8 = scmp.ge.s32.totalorder %s7, 4
    %s14 = sphi 0, %s26
    %s15 = sphi 0, %s22
    %s16 = sphi 0, %s14
    %s17 = sphi 0, %s15
    %s18 = sphi 0, %s16
    %s19 = sphi 0, %s17
    %s31 = sphi 0, %s33
    %s34 = sphi 0, %s31
    %s35 = sphi 0, %s34
    %s51 = sphi 0, %s35
    %s59 = sphi 0, %s61
    %s62 = sphi 0, %s59
    %s63 = sphi 0, %s62
    %s79 = sphi 0, %s63
  $region4: #{half_instance_forward.1} parent=0 // loop_header_branch
    %10 = sbr.rel (%p8) target = $region8
  $region5: #{half_instance_forward.1} parent=0 // loop_body
    %s12 = ssub.s32 %s7, 1
    %s13 = ssub.s32 %s7, 2
    %s20 = sadd.s32 1, %s15
    %p21 = scmp.ge.s32.totalorder %s20, 1
    %s22 = scalar_select %p21, 0, %s20
    %s23 = sadd.s32 1, %s14
    %s24 = scalar_select %p21, %s23, %s14
    %p25 = scmp.ge.s32.totalorder %s24, 2
    %s26 = scalar_select %p25, 0, %s24
    %s27 = ssub.s32 %s14, %s26
    %s28 = ssub.s32 %s15, %s22
    %s29 = sor.u32 %s27, %s28
    %p30 = scmp.eq.s32.totalorder %s29, 0
    %s32 = sadd.s32 %s31, 1
    %s33 = scalar_select %p30, %s31, %s32
    %p36 = pneg %p30
    %p37 = scmp.eq.s32.totalorder %s7, 1
    %p38 = por %p36, %p37
    %p39 = scmp.ne.s32.totalorder %s31, %s34
    %p40 = scmp.eq.s32.totalorder %s7, 0
    %p41 = por %p39, %p40
    %p42 = scmp.ne.s32.totalorder %s31, %s34
    %p43 = scmp.eq.s32.totalorder %s12, 1
    %p44 = por %p42, %p43
    %p45 = scmp.ne.s32.totalorder %s34, %s35
    %p46 = scmp.eq.s32.totalorder %s12, 0
    %p47 = por %p45, %p46
    %p48 = scmp.ne.s32.totalorder %s34, %s35
    %p49 = scmp.eq.s32.totalorder %s13, 1
    %p50 = por %p48, %p49
    %p52 = scmp.ne.s32.totalorder %s35, %s51
    %p53 = scmp.eq.s32.totalorder %s13, 0
    %p54 = por %p52, %p53
    %s55 = ssub.s32 %s14, %s26
    %s56 = ssub.s32 %s15, %s22
    %s57 = sor.u32 %s55, %s56
    %p58 = scmp.eq.s32.totalorder %s57, 0
    %s60 = sadd.s32 %s59, 1
    %s61 = scalar_select %p58, %s59, %s60
    %p64 = pneg %p58
    %p65 = scmp.eq.s32.totalorder %s7, 1
    %p66 = por %p64, %p65
    %p67 = scmp.ne.s32.totalorder %s59, %s62
    %p68 = scmp.eq.s32.totalorder %s7, 0
    %p69 = por %p67, %p68
    %p70 = scmp.ne.s32.totalorder %s59, %s62
    %p71 = scmp.eq.s32.totalorder %s12, 1
    %p72 = por %p70, %p71
    %p73 = scmp.ne.s32.totalorder %s62, %s63
    %p74 = scmp.eq.s32.totalorder %s12, 0
    %p75 = por %p73, %p74
    %p76 = scmp.ne.s32.totalorder %s62, %s63
    %p77 = scmp.eq.s32.totalorder %s13, 1
    %p78 = por %p76, %p77
    %p80 = scmp.ne.s32.totalorder %s63, %s79
    %p81 = scmp.eq.s32.totalorder %s13, 0
    %p82 = por %p80, %p81
    %p83 = scmp.le.s32.totalorder 1, %s7
    %p84 = scmp.lt.s32.totalorder %s7, 3
    %p85 = pnand %p83, %p84
    %p86 = pneg %p85
    // Predicated region
    $region9: #{half_instance_forward.1} parent=5 // pred_check
      _
    $region10: #{half_instance_forward.1} parent=5 // pred_check_branch
      %88 = sbr.rel (%p85) target = $region12
    $region11: #{half_instance_forward.1} parent=5 // pred_region
      %s89 = ssub.s32 %s7, 1
    $region12: #{half_instance_forward.1} parent=5 // pred_fallthru
      _
    %p90 = scmp.lt.s32.totalorder %s7, 2
    // Predicated region
    $region13: #{half_instance_forward.1} parent=5 // pred_check
      %p91 = pneg %p90
    $region14: #{half_instance_forward.1} parent=5 // pred_check_branch
      %93 = sbr.rel (%p91) target = $region16
    $region15: #{half_instance_forward.1} parent=5 // pred_region
      // Predicated region
      $region17: #{half_instance_forward.1} parent=15 // pred_check
        %p94 = pneg %p41
      $region18: #{half_instance_forward.1} parent=15 // pred_check_branch
        %96 = sbr.rel (%p94) target = $region20
      $region19: #{half_instance_forward.1} parent=15 // pred_region
        %p97 = scmp.lt.s32.totalorder %s14, 1
        %s98 = scalar_select %p97, %s14, 1
        %p99 = scmp.lt.s32.totalorder %s15, 0
        %s100 = scalar_select %p99, %s15, 0
        %s101 = smul.addr %s100, 2
        %s102 = smul.addr %s98, 4
        %s103 = sadd.s32 %s101, %s102
        %s104 = smul.addr %s103, 2
        %s105 = scalar_lea.vmem %s0, %s104
      $region20: #{half_instance_forward.1} parent=15 // pred_fallthru
        _
    $region16: #{half_instance_forward.1} parent=5 // pred_fallthru
      _
    %p106 = scmp.le.s32.totalorder 1, %s7
    %p107 = scmp.lt.s32.totalorder %s7, 3
    %p108 = pnand %p106, %p107
    %p109 = pneg %p108
    // Predicated region
    $region21: #{half_instance_forward.1} parent=5 // pred_check
      _
    $region22: #{half_instance_forward.1} parent=5 // pred_check_branch
      %111 = sbr.rel (%p108) target = $region24
    $region23: #{half_instance_forward.1} parent=5 // pred_region
      %s112 = ssub.s32 %s7, 1
      %p113 = scmp.lt.s32.totalorder %s16, 1
      %s114 = scalar_select %p113, %s16, 1
      %p115 = scmp.lt.s32.totalorder %s17, 0
      %s116 = scalar_select %p115, %s17, 0
      %s117 = smul.addr %s116, 2
      %s118 = smul.addr %s114, 4
      %s119 = sadd.s32 %s117, %s118
      %s120 = smul.addr %s119, 2
      %s121 = scalar_lea.vmem %s0, %s120
      %p122 = pneg %p47
      %p123 = pneg %p44
      %p124 = pneg %p75
      %p125 = pneg %p72
      %p126 = scmp.lt.s32.totalorder %s16, 1
      %s127 = scalar_select %p126, %s16, 1
      %p128 = scmp.lt.s32.totalorder %s17, 0
      %s129 = scalar_select %p128, %s17, 0
      %s130 = smul.addr %s129, 2
      %s131 = smul.addr %s127, 4
      %s132 = sadd.s32 %s130, %s131
      %s133 = smul.addr %s132, 2
      %s134 = scalar_lea.vmem %s1, %s133
      %p135 = scmp.lt.s32.totalorder %s16, 1
      %s136 = scalar_select %p135, %s16, 1
      %p137 = scmp.lt.s32.totalorder %s17, 0
      %s138 = scalar_select %p137, %s17, 0
      %s139 = smul.addr %s138, 2
      %s140 = smul.addr %s136, 4
      %s141 = sadd.s32 %s139, %s140
      %s142 = smul.addr %s141, 2
      %s143 = scalar_lea.vmem %s0, %s142
      %p144 = scmp.lt.s32.totalorder %s16, 1
      %s145 = scalar_select %p144, %s16, 1
      %p146 = scmp.lt.s32.totalorder %s17, 0
      %s147 = scalar_select %p146, %s17, 0
      %s148 = smul.addr %s147, 2
      %s149 = smul.addr %s145, 4
      %s150 = sadd.s32 %s148, %s149
      %s151 = smul.addr %s150, 2
      %s152 = scalar_lea.vmem %s1, %s151
      %v153 = vld [vmem:[%s143] sm:$0xf]
      %155 = vst [vmem:[#allocation1] ss:$4 sm:$0xff] %v153
      %v156 = vld.sshfl [vmem:[#allocation1] sm:$0xff pattern:$0x73625140]
      %v157 = vld.sshfl [vmem:[#allocation1 + $0x8] sm:$0xff pattern:$0x73625140]
      %vm160 = vcmask 1041408
      %v161 = vsel %vm160, %v156, 0.0
      %v162 = vsel %vm160, %v157, 0.0
      %v163 = vadd.f32 %v161, %v162
      %164 = vadd.xlane.f32.xlu0 %v163
      %v165 = vpop.xlane.xlu0 %164
      %v166 = vmul.f32 %v153, %v153
      %168 = vst [vmem:[#allocation1] ss:$4 sm:$0xff] %v166
      %v169 = vld.sshfl [vmem:[#allocation1] sm:$0xff pattern:$0x73625140]
      %v170 = vld.sshfl [vmem:[#allocation1 + $0x8] sm:$0xff pattern:$0x73625140]
      %v173 = vsel %vm160, %v169, 0.0
      %v174 = vsel %vm160, %v170, 0.0
      %v175 = vadd.f32 %v173, %v174
      %176 = vadd.xlane.f32.xlu0 %v175
      %v177 = vpop.xlane.xlu0 %176
      %v178 = vmul.f32 %v165, 0.00390625
      %v179 = vmul.f32 %v177, 0.00390625
      %v180 = vmul.f32 %v178, %v178
      %v181 = vsub.f32 %v179, %v180
      %v182 = vmax.f32 %v181, 0.0
      %v185 = vunpack.c.l.s4 269488144
      %v186 = vunpack.c.0.s8 %v185
      %v187 = vperm.slane %v178, %v186
      %v189 = vsub.f32 %v153, %v187
      %v190 = vadd.f32 %v182, 1e-05
      %v191 = vrsqrt.pop %v190
      %v192 = vmul.f32 %v191, %v190
      %v193 = vmul.f32 %v192, %v191
      %v194 = vmul.f32 0.5, %v193
      %v195 = vsub.f32 1.5, %v194
      %v196 = vmul.f32 %v191, %v195
      %vm197 = vweird.f32 %v190
      %vm198 = vweird.f32 %v191
      %vm199 = vmor %vm197, %vm198
      %v200 = vsel %vm199, %v191, %v196
      %v203 = vunpack.c.l.s4 269488144
      %v204 = vunpack.c.0.s8 %v203
      %v205 = vperm.slane %v200, %v204
      %v207 = vmul.f32 %v189, %v205
      %208 = vst [vmem:[%s152] sm:$0xf] %v207
      %p209 = scmp.lt.s32.totalorder %s16, 1
      %s210 = scalar_select %p209, %s16, 1
      %p211 = scmp.lt.s32.totalorder %s17, 0
      %s212 = scalar_select %p211, %s17, 0
      %s213 = smul.addr %s212, 2
      %s214 = smul.addr %s210, 4
      %s215 = sadd.s32 %s213, %s214
      %s216 = smul.addr %s215, 2
      %s217 = scalar_lea.vmem %s1, %s216
      // Predicated region
      $region25: #{half_instance_forward.1} parent=23 // pred_check
        %p218 = pneg %p72
      $region26: #{half_instance_forward.1} parent=23 // pred_check_branch
        %220 = sbr.rel (%p218) target = $region28
      $region27: #{half_instance_forward.1} parent=23 // pred_region
        _
      $region28: #{half_instance_forward.1} parent=23 // pred_fallthru
        _
    $region24: #{half_instance_forward.1} parent=5 // pred_fallthru
      _
    %p221 = scmp.le.s32.totalorder 2, %s7
    // Predicated region
    $region29: #{half_instance_forward.1} parent=5 // pred_check
      %p222 = pneg %p221
    $region30: #{half_instance_forward.1} parent=5 // pred_check_branch
      %224 = sbr.rel (%p222) target = $region32
    $region31: #{half_instance_forward.1} parent=5 // pred_region
      %s225 = ssub.s32 %s7, 2
      // Predicated region
      $region33: #{half_instance_forward.1} parent=31 // pred_check
        %p226 = pneg %p78
      $region34: #{half_instance_forward.1} parent=31 // pred_check_branch
        %228 = sbr.rel (%p226) target = $region36
      $region35: #{half_instance_forward.1} parent=31 // pred_region
        %p229 = scmp.lt.s32.totalorder %s18, 1
        %s230 = scalar_select %p229, %s18, 1
        %p231 = scmp.lt.s32.totalorder %s19, 0
        %s232 = scalar_select %p231, %s19, 0
        %s233 = smul.addr %s232, 2
        %s234 = smul.addr %s230, 4
        %s235 = sadd.s32 %s233, %s234
        %s236 = smul.addr %s235, 2
        %s237 = scalar_lea.vmem %s1, %s236
      $region36: #{half_instance_forward.1} parent=31 // pred_fallthru
        _
    $region32: #{half_instance_forward.1} parent=5 // pred_fallthru
      _
  $region6: #{half_instance_forward.1} parent=0 // loop_footer
    %s11 = sadd.s32 1, %s7
  $region7: #{half_instance_forward.1} parent=0 // loop_footer_branch
    %6 = sbr.rel target = $region3
  $region8: #{half_instance_forward.1} parent=0 // loop_exit
    _

</llo_original>
